<compile_context>
chip_gen: v6e
topology: v6e:2x2x1
jax: 0.10.0
libtpu: 0.0.40
codegen_flags: <defaults>
</compile_context>

<pallas_src>
import functools

import jax
import jax.numpy as jnp
from jax import lax
from jax.experimental import pallas as pl
from jax.experimental.pallas import tpu as pltpu


def _round_up(x, m):
    return ((x + m - 1) // m) * m


# ---------------------------------------------------------------------------
# Stage 1: time-parallel matmul + bias, tiled over rows (M) and cols (N)
# ---------------------------------------------------------------------------
def _matmul_bias_kernel(x_ref, w_ref, b_ref, o_ref):
    o_ref[...] = (
        jnp.dot(x_ref[...], w_ref[...], preferred_element_type=jnp.float32)
        + b_ref[...]
    ).astype(o_ref.dtype)


def _linear(x2d, w_t, b_row, *, block_rows=256, block_cols=512):
    """out = x2d @ w_t + b_row.  x2d (M,K), w_t (K,N), b_row (1,N), out f32 (M,N).

    M is padded to a multiple of the row tile, N to a multiple of the col tile
    (zero padding, sliced off) so we never revert to a grid=(1,) whole-array kernel.
    K (<= a few thousand) is kept resident per tile.
    """
    M, K = x2d.shape
    N = w_t.shape[1]

    bm = min(block_rows, _round_up(M, 8))     # row tile (multiple of 8)
    bn = min(block_cols, N)                   # col tile (N already mult of 128)
    M_pad = _round_up(M, bm)
    N_pad = _round_up(N, bn)
    if M_pad != M:
        x2d = jnp.pad(x2d, ((0, M_pad - M), (0, 0)))
    if N_pad != N:
        w_t = jnp.pad(w_t, ((0, 0), (0, N_pad - N)))
        b_row = jnp.pad(b_row, ((0, 0), (0, N_pad - N)))

    grid = (M_pad // bm, N_pad // bn)
    out = pl.pallas_call(
        _matmul_bias_kernel,
        out_shape=jax.ShapeDtypeStruct((M_pad, N_pad), jnp.float32),
        grid_spec=pltpu.PrefetchScalarGridSpec(
            num_scalar_prefetch=0,
            grid=grid,
            in_specs=[
                pl.BlockSpec((bm, K), lambda i, j: (i, 0)),
                pl.BlockSpec((K, bn), lambda i, j: (0, j)),
                pl.BlockSpec((1, bn), lambda i, j: (0, j)),
            ],
            out_specs=pl.BlockSpec((bm, bn), lambda i, j: (i, j)),
        ),
        compiler_params=pltpu.CompilerParams(
            dimension_semantics=("parallel", "parallel"),  # megacore-shardable
        ),
    )(x2d, w_t, b_row)
    return out[:M, :N]


# ---------------------------------------------------------------------------
# Stage 2+3 fused: T-blocked tanh recurrence + FC head (vocab-tiled)
# ---------------------------------------------------------------------------
def _rnn_recurrence_fc_kernel(p_ref, h0_ref, w_hh_ref, w_fc_ref, b_fc_ref,
                              out_ref, hN_ref, h_carry, y_scr,
                              *, seq_len, mm_dtype):
    """Per grid step (time-block ti, vocab-tile vi):

    p_ref   : (T_blk, B, H) f32   precomputed x @ W_ih^T + (b_ih + b_hh)
    h0_ref  : (B, H)        f32   initial hidden state
    w_hh_ref: (H, H)        mm    hidden->hidden weights (transposed)
    w_fc_ref: (H, V_blk)    mm    FC weights tile (transposed)
    b_fc_ref: (1, V_blk)    f32   FC bias tile
    out_ref : (T_blk, B, V_blk)   logits tile
    hN_ref  : (B, H)              final hidden state (resident accumulator)
    h_carry : VMEM (B, H)   f32   hidden state carried across time-blocks
    y_scr   : VMEM (T_blk, B, H)  hidden states of the current time-block
    """
    ti = pl.program_id(0)
    vi = pl.program_id(1)
    t_blk = p_ref.shape[0]

    @pl.when(jnp.logical_and(ti == 0, vi == 0))
    def _():
        h_carry[...] = h0_ref[...].astype(jnp.float32)

    # Serial recurrence: run once per time-block (first vocab tile only).
    @pl.when(vi == 0)
    def _():
        w_hh = w_hh_ref[...]                     # hoisted: loaded once per block
        t0 = ti * t_blk

        def step(t, h_prev):
            pre = jnp.dot(h_prev.astype(mm_dtype), w_hh,
                          preferred_element_type=jnp.float32) + p_ref[t]
            h_new = jnp.tanh(pre)                # f32 add + f32 tanh (EUP)
            y_scr[t] = h_new
            # Mask time-padding: padded steps do not advance the carry.
            return jnp.where(t0 + t < seq_len, h_new, h_prev)

        h_final = lax.fori_loop(0, t_blk, step, h_carry[...],
                                unroll=min(8, t_blk))
        h_carry[...] = h_final
        hN_ref[...] = h_final

    # Fused FC head for this (time-block, vocab-tile): hidden states stay in VMEM.
    tb, B, H = y_scr.shape
    y2d = y_scr[...].reshape(tb * B, H).astype(mm_dtype)
    logits = (jnp.dot(y2d, w_fc_ref[...], preferred_element_type=jnp.float32)
              + b_fc_ref[...])
    out_ref[...] = logits.reshape(tb, B, -1).astype(out_ref.dtype)


def _rnn_recurrence_fc(p, h0, w_hh_t, w_fc_t, b_fc, *, seq_len, t_block,
                       v_block, mm_dtype):
    T_pad0, B, H = p.shape
    V = w_fc_t.shape[1]

    t_blk = min(t_block, T_pad0)
    T_pad = _round_up(T_pad0, t_blk)
    if T_pad != T_pad0:
        p = jnp.pad(p, ((0, T_pad - T_pad0), (0, 0), (0, 0)))

    v_blk = min(v_block, V)
    V_pad = _round_up(V, v_blk)
    if V_pad != V:
        w_fc_t = jnp.pad(w_fc_t, ((0, 0), (0, V_pad - V)))
        b_fc = jnp.pad(b_fc, ((0, 0), (0, V_pad - V)))

    n_t = T_pad // t_blk
    n_v = V_pad // v_blk

    kernel = functools.partial(_rnn_recurrence_fc_kernel,
                               seq_len=seq_len, mm_dtype=mm_dtype)

    out_p, hN = pl.pallas_call(
        kernel,
        out_shape=(
            jax.ShapeDtypeStruct((T_pad, B, V_pad), jnp.float32),
            jax.ShapeDtypeStruct((B, H), jnp.float32),
        ),
        grid_spec=pltpu.PrefetchScalarGridSpec(
            num_scalar_prefetch=0,
            grid=(n_t, n_v),
            in_specs=[
                pl.BlockSpec((t_blk, B, H), lambda i, j: (i, 0, 0)),   # P block
                pl.BlockSpec((B, H), lambda i, j: (0, 0)),             # h0
                pl.BlockSpec((H, H), lambda i, j: (0, 0)),             # W_hh
                pl.BlockSpec((H, v_blk), lambda i, j: (0, j)),         # W_fc tile
                pl.BlockSpec((1, v_blk), lambda i, j: (0, j)),         # b_fc tile
            ],
            out_specs=[
                pl.BlockSpec((t_blk, B, v_blk), lambda i, j: (i, 0, j)),
                pl.BlockSpec((B, H), lambda i, j: (0, 0)),
            ],
            scratch_shapes=[
                pltpu.VMEM((B, H), jnp.float32),        # carried hidden state
                pltpu.VMEM((t_blk, B, H), jnp.float32), # hidden states of block
            ],
        ),
        compiler_params=pltpu.CompilerParams(
            # Both axes carry state (h across time, y_scr across vocab tiles).
            dimension_semantics=("arbitrary", "arbitrary"),
        ),
    )(p, h0, w_hh_t, w_fc_t, b_fc)
    return out_p[:T_pad0], hN


# ---------------------------------------------------------------------------
# Full forward
# ---------------------------------------------------------------------------
def rnn_model_forward(x, h_state, params, *, use_bf16_matmul=False,
                      linear_block_rows=256, linear_block_cols=512,
                      t_block=64):
    """x: (T, B, I) f32, h_state: (1, B, H) f32 -> (out (T,B,V), h_state (1,B,H))."""
    T, B, I = x.shape
    H = params["w_hh"].shape[0]
    V = params["w_fc"].shape[0]

    # Lane/sublane-dense padding (zero padding preserves the math exactly:
    # padded hidden/input/vocab dims stay identically 0 through the recurrence).
    B_pad = _round_up(B, 8)
    I_pad = _round_up(I, 128)
    H_pad = _round_up(H, 128)
    V_pad = _round_up(V, 128)

    mm_dtype = jnp.bfloat16 if use_bf16_matmul else jnp.float32

    def pad2(a, r, c):
        return jnp.pad(a, ((0, r - a.shape[0]), (0, c - a.shape[1])))

    w_ih_t = pad2(params["w_ih"].T, I_pad, H_pad)                        # (I_pad,H_pad)
    w_hh_t = pad2(params["w_hh"].T, H_pad, H_pad)                        # (H_pad,H_pad)
    b_h = jnp.pad(params["b_ih"] + params["b_hh"], (0, H_pad - H))[None] # (1,H_pad)
    w_fc_t = pad2(params["w_fc"].T, H_pad, V_pad)                        # (H_pad,V_pad)
    b_fc = jnp.pad(params["b_fc"], (0, V_pad - V))[None]                 # (1,V_pad)

    x_p = jnp.pad(x, ((0, 0), (0, B_pad - B), (0, I_pad - I)))
    h0_p = jnp.pad(h_state[0], ((0, B_pad - B), (0, H_pad - H)))

    # Stage 1: input projection for ALL time steps at once (time-independent).
    x2d = x_p.reshape(T * B_pad, I_pad).astype(mm_dtype)
    p = _linear(x2d, w_ih_t.astype(mm_dtype), b_h,
                block_rows=linear_block_rows, block_cols=linear_block_cols)
    p = p.reshape(T, B_pad, H_pad)

    # Stage 2+3 fused: T-blocked tanh recurrence + vocab-tiled FC head.
    out_p, hN_p = _rnn_recurrence_fc(
        p, h0_p, w_hh_t.astype(mm_dtype), w_fc_t.astype(mm_dtype), b_fc,
        seq_len=T, t_block=t_block, v_block=linear_block_cols,
        mm_dtype=mm_dtype)

    out = out_p[:T, :B, :V]
    hN = hN_p[:B, :H]
    return out, hN[None, :, :]


# ---------------------------------------------------------------------------
# Pure-JAX reference (matches PyTorch nn.RNN(tanh) + nn.Linear)
# ---------------------------------------------------------------------------
def rnn_model_reference(x, h_state, params):
    h = h_state[0]
    w_ih, w_hh = params["w_ih"], params["w_hh"]
    b_ih, b_hh = params["b_ih"], params["b_hh"]
    ys = []
    for t in range(x.shape[0]):
        h = jnp.tanh(x[t] @ w_ih.T + b_ih + h @ w_hh.T + b_hh)
        ys.append(h)
    y = jnp.stack(ys, axis=0)
    out = y @ params["w_fc"].T + params["b_fc"]
    return out, h[None, :, :]


if __name__ == "__main__":
    # Small shapes consistent with the module's forward.
    T, B, I, H, V = 8, 2, 16, 32, 64   # seq, batch, input_size, hidden_size, vocab

    key = jax.random.PRNGKey(0)
    ks = jax.random.split(key, 8)
    scale = 0.1
    params = {
        "w_ih": scale * jax.random.normal(ks[0], (H, I), jnp.float32),   # weight_ih_l0
        "w_hh": scale * jax.random.normal(ks[1], (H, H), jnp.float32),   # weight_hh_l0
        "b_ih": scale * jax.random.normal(ks[2], (H,), jnp.float32),
        "b_hh": scale * jax.random.normal(ks[3], (H,), jnp.float32),
        "w_fc": scale * jax.random.normal(ks[4], (V, H), jnp.float32),   # Linear weight
        "b_fc": scale * jax.random.normal(ks[5], (V,), jnp.float32),
    }

    x = jax.random.normal(ks[6], (T, B, I), jnp.float32)
    h0 = jax.random.normal(ks[7], (1, B, H), jnp.float32)

    out_ref, h_ref = rnn_model_reference(x, h0, params)

    # f32 path -- small tiles so the demo exercises M-tiling and T-blocking.
    out, h_new = rnn_model_forward(x, h0, params, use_bf16_matmul=False,
                                   linear_block_rows=32, t_block=4)
    out, h_new = jax.block_until_ready((out, h_new))
    assert out.shape == (T, B, V) and h_new.shape == (1, B, H)
    assert jnp.allclose(out, out_ref, rtol=1e-4, atol=1e-4)
    assert jnp.allclose(h_new, h_ref, rtol=1e-4, atol=1e-4)

    # bf16-operand path (full-rate MXU on v6e/v7x); looser tolerance for bf16.
    out_b, h_b = rnn_model_forward(x, h0, params, use_bf16_matmul=True,
                                   linear_block_rows=32, t_block=4)
    out_b, h_b = jax.block_until_ready((out_b, h_b))
    assert jnp.allclose(out_b, out_ref, rtol=5e-2, atol=5e-2)
    assert jnp.allclose(h_b, h_ref, rtol=5e-2, atol=5e-2)

    print("KERNEL_OK")
</pallas_src>

<mosaic_0001>
module attributes {stable_mosaic.version = 11 : i64} {
  func.func @_matmul_bias_kernel(%arg0: i32, %arg1: i32, %arg2: memref<32x128xf32, #tpu.memory_space<vmem>>, %arg3: memref<128x128xf32, #tpu.memory_space<vmem>>, %arg4: memref<1x128xf32, #tpu.memory_space<vmem>>, %arg5: memref<32x128xf32, #tpu.memory_space<vmem>>) attributes {dimension_semantics = [#tpu.dimension_semantics<parallel>, #tpu.dimension_semantics<parallel>], iteration_bounds = array<i64: 2, 1>, scalar_prefetch = 0 : i64, scratch_operands = 0 : i64, tpu.core_type = #tpu.core_type<tc>, window_params = [{transform_indices = @transform_0, window_bounds = array<i64: 32, 128>}, {transform_indices = @transform_1, window_bounds = array<i64: 128, 128>}, {transform_indices = @transform_2, window_bounds = array<i64: 1, 128>}, {transform_indices = @transform_3, window_bounds = array<i64: 32, 128>}]} {
    %c0 = arith.constant 0 : index
    %c0_0 = arith.constant 0 : index
    %0 = vector.load %arg2[%c0, %c0_0] : memref<32x128xf32, #tpu.memory_space<vmem>>, vector<32x128xf32>
    %c0_1 = arith.constant 0 : index
    %c0_2 = arith.constant 0 : index
    %1 = vector.load %arg3[%c0_1, %c0_2] : memref<128x128xf32, #tpu.memory_space<vmem>>, vector<128x128xf32>
    %cst = arith.constant dense<0.000000e+00> : vector<32x128xf32>
    %2 = tpu.matmul %0, %1, %cst {dimension_numbers = #tpu.dot_dimension_numbers<[1], [0], [0], [1], [0, 0, 1, 1], [], []>} : vector<32x128xf32>, vector<128x128xf32>, vector<32x128xf32> -> vector<32x128xf32>
    %c0_3 = arith.constant 0 : index
    %c0_4 = arith.constant 0 : index
    %3 = vector.load %arg4[%c0_3, %c0_4] : memref<1x128xf32, #tpu.memory_space<vmem>>, vector<1x128xf32>
    %4 = vector.broadcast %3 : vector<1x128xf32> to vector<32x128xf32>
    %5 = arith.addf %2, %4 : vector<32x128xf32>
    %c0_5 = arith.constant 0 : index
    %c0_6 = arith.constant 0 : index
    %6 = vector.load %arg5[%c0_5, %c0_6] : memref<32x128xf32, #tpu.memory_space<vmem>>, vector<32x128xf32>
    tpu.vector_store %arg5[%c0_5, %c0_6], %5 {strides = array<i32>} : memref<32x128xf32, #tpu.memory_space<vmem>>, vector<32x128xf32>,
    return
  }
  func.func @transform_0(%arg0: i32, %arg1: i32) -> (i32, i32) {
    %c0_i32 = arith.constant 0 : i32
    %c0_i32_0 = arith.constant 0 : i32
    return %arg0, %c0_i32 : i32, i32
  }
  func.func @transform_1(%arg0: i32, %arg1: i32) -> (i32, i32) {
    %c0_i32 = arith.constant 0 : i32
    %c0_i32_0 = arith.constant 0 : i32
    return %c0_i32, %arg1 : i32, i32
  }
  func.func @transform_2(%arg0: i32, %arg1: i32) -> (i32, i32) {
    %c0_i32 = arith.constant 0 : i32
    %c0_i32_0 = arith.constant 0 : i32
    return %c0_i32, %arg1 : i32, i32
  }
  func.func @transform_3(%arg0: i32, %arg1: i32) -> (i32, i32) {
    %c0_i32 = arith.constant 0 : i32
    return %arg0, %arg1 : i32, i32
  }
}

</mosaic_0001>

<llo_original>
// kernel: tpu_custom_call.1
$region0: #{tpu_custom_call.1}
  #allocation0 [shape = 'u32[]', space=smem, size = 0x4, offset = 0x4, fixed_abs, tag = 'smem constant byte address 0x4 - core index']
  #allocation1 [shape = 'u32[144,128]{1,0:T(1,128)}', space=vmem, size = 0x12000, scoped, tag = 'internal scratch']
  %s0 = inlined_call_operand.hbm [shape: f32[64,128], index: 0, kind: input, shape index: {}]
  %s1 = inlined_call_operand.hbm [shape: f32[128,128], index: 1, kind: input, shape index: {}]
  %s2 = inlined_call_operand.vmem [shape: f32[1,128], index: 2, kind: input, shape index: {}]
  %s3 = inlined_call_operand.hbm [shape: f32[64,128], index: 3, kind: output, shape index: {}]
  %s4 = sld [smem:[#allocation0]]
  $region53: #{tpu_custom_call.1} parent=0
    _
  %s6 = ssub.s32 1, %s4
  %s7 = scalar_select 0, %s6, %s4
  $region1: #{tpu_custom_call.1} parent=0
    #allocation2 [shape = 'u8[32768]{0}', space=vmem, size = 0x8000, scoped, tag = 'input window, operand 0']
    #allocation3 [shape = 's32[2]{0}', space=sflag, size = 0x8, scoped, tag = 'scoped memory for tpu_custom_call.1']
    #allocation4 [shape = 's32[2]{0}', space=sflag, size = 0x8, scoped, tag = 'scoped memory for tpu_custom_call.1']
    #allocation5 [shape = 'u8[65536]{0}', space=vmem, size = 0x10000, scoped, tag = 'input window, operand 1, single buffered']
    #allocation6 [shape = 's32[1]{0}', space=sflag, size = 0x4, scoped, tag = 'scoped memory for tpu_custom_call.1']
    #allocation7 [shape = 'u8[32768]{0}', space=vmem, size = 0x8000, scoped, tag = 'output window, operand 0']
    %8 = vsyncpa [#allocation3], 0
    %s9 = scalar_lea.sflag [#allocation3], 1
    %10 = vsyncpa %s9, 0
    %11 = vsyncpa [#allocation6], 0
    %12 = vsyncpa [#allocation4], 0
    %s13 = scalar_lea.sflag [#allocation4], 1
    %14 = vsyncpa %s13, 0
    loop: start=0, step=1, limit=4
    $region2: #{tpu_custom_call.1} parent=1 // loop_pre_header
      _
    $region3: #{tpu_custom_call.1} parent=1 // loop_header
      %s16 = sphi 0, %s20
      %p17 = scmp.ge.s32.totalorder %s16, 4
      %s23 = sphi 0, %s35
      %s24 = sphi 0, %s31
      %s25 = sphi 0, %s23
      %s26 = sphi 0, %s24
      %s27 = sphi 0, %s25
      %s28 = sphi 0, %s26
      %s38 = sphi 0, %s40
      %s41 = sphi 0, %s38
      %s42 = sphi 0, %s41
      %s58 = sphi 0, %s42
      %s64 = sphi 0, %s66
      %s67 = sphi 0, %s64
      %s68 = sphi 0, %s67
      %s84 = sphi 0, %s68
      %s90 = sphi 0, %s92
      %s93 = sphi 0, %s90
      %s94 = sphi 0, %s93
      %s110 = sphi 0, %s94
      %s118 = sphi 0, %s120
      %s121 = sphi 0, %s118
      %s122 = sphi 0, %s121
      %s138 = sphi 0, %s122
    $region4: #{tpu_custom_call.1} parent=1 // loop_header_branch
      %19 = sbr.rel (%p17) target = $region8
    $region5: #{tpu_custom_call.1} parent=1 // loop_body
      %s21 = ssub.s32 %s16, 1
      %s22 = ssub.s32 %s16, 2
      %s29 = sadd.s32 1, %s24
      %p30 = scmp.ge.s32.totalorder %s29, 1
      %s31 = scalar_select %p30, 0, %s29
      %s32 = sadd.s32 1, %s23
      %s33 = scalar_select %p30, %s32, %s23
      %p34 = scmp.ge.s32.totalorder %s33, 2
      %s35 = scalar_select %p34, 0, %s33
      %s36 = ssub.s32 %s23, %s35
      %p37 = scmp.eq.s32.totalorder %s36, 0
      %s39 = sadd.s32 %s38, 1
      %s40 = scalar_select %p37, %s38, %s39
      %p43 = pneg %p37
      %p44 = scmp.eq.s32.totalorder %s16, 1
      %p45 = por %p43, %p44
      %p46 = scmp.ne.s32.totalorder %s38, %s41
      %p47 = scmp.eq.s32.totalorder %s16, 0
      %p48 = por %p46, %p47
      %p49 = scmp.ne.s32.totalorder %s38, %s41
      %p50 = scmp.eq.s32.totalorder %s21, 1
      %p51 = por %p49, %p50
      %p52 = scmp.ne.s32.totalorder %s41, %s42
      %p53 = scmp.eq.s32.totalorder %s21, 0
      %p54 = por %p52, %p53
      %p55 = scmp.ne.s32.totalorder %s41, %s42
      %p56 = scmp.eq.s32.totalorder %s22, 1
      %p57 = por %p55, %p56
      %p59 = scmp.ne.s32.totalorder %s42, %s58
      %p60 = scmp.eq.s32.totalorder %s22, 0
      %p61 = por %p59, %p60
      %s62 = ssub.s32 %s24, %s31
      %p63 = scmp.eq.s32.totalorder %s62, 0
      %s65 = sadd.s32 %s64, 1
      %s66 = scalar_select %p63, %s64, %s65
      %p69 = pneg %p63
      %p70 = scmp.eq.s32.totalorder %s16, 1
      %p71 = por %p69, %p70
      %p72 = scmp.ne.s32.totalorder %s64, %s67
      %p73 = scmp.eq.s32.totalorder %s16, 0
      %p74 = por %p72, %p73
      %p75 = scmp.ne.s32.totalorder %s64, %s67
      %p76 = scmp.eq.s32.totalorder %s21, 1
      %p77 = por %p75, %p76
      %p78 = scmp.ne.s32.totalorder %s67, %s68
      %p79 = scmp.eq.s32.totalorder %s21, 0
      %p80 = por %p78, %p79
      %p81 = scmp.ne.s32.totalorder %s67, %s68
      %p82 = scmp.eq.s32.totalorder %s22, 1
      %p83 = por %p81, %p82
      %p85 = scmp.ne.s32.totalorder %s68, %s84
      %p86 = scmp.eq.s32.totalorder %s22, 0
      %p87 = por %p85, %p86
      %s88 = ssub.s32 %s24, %s31
      %p89 = scmp.eq.s32.totalorder %s88, 0
      %s91 = sadd.s32 %s90, 1
      %s92 = scalar_select %p89, %s90, %s91
      %p95 = pneg %p89
      %p96 = scmp.eq.s32.totalorder %s16, 1
      %p97 = por %p95, %p96
      %p98 = scmp.ne.s32.totalorder %s90, %s93
      %p99 = scmp.eq.s32.totalorder %s16, 0
      %p100 = por %p98, %p99
      %p101 = scmp.ne.s32.totalorder %s90, %s93
      %p102 = scmp.eq.s32.totalorder %s21, 1
      %p103 = por %p101, %p102
      %p104 = scmp.ne.s32.totalorder %s93, %s94
      %p105 = scmp.eq.s32.totalorder %s21, 0
      %p106 = por %p104, %p105
      %p107 = scmp.ne.s32.totalorder %s93, %s94
      %p108 = scmp.eq.s32.totalorder %s22, 1
      %p109 = por %p107, %p108
      %p111 = scmp.ne.s32.totalorder %s94, %s110
      %p112 = scmp.eq.s32.totalorder %s22, 0
      %p113 = por %p111, %p112
      %s114 = ssub.s32 %s23, %s35
      %s115 = ssub.s32 %s24, %s31
      %s116 = sor.u32 %s114, %s115
      %p117 = scmp.eq.s32.totalorder %s116, 0
      %s119 = sadd.s32 %s118, 1
      %s120 = scalar_select %p117, %s118, %s119
      %p123 = pneg %p117
      %p124 = scmp.eq.s32.totalorder %s16, 1
      %p125 = por %p123, %p124
      %p126 = scmp.ne.s32.totalorder %s118, %s121
      %p127 = scmp.eq.s32.totalorder %s16, 0
      %p128 = por %p126, %p127
      %p129 = scmp.ne.s32.totalorder %s118, %s121
      %p130 = scmp.eq.s32.totalorder %s21, 1
      %p131 = por %p129, %p130
      %p132 = scmp.ne.s32.totalorder %s121, %s122
      %p133 = scmp.eq.s32.totalorder %s21, 0
      %p134 = por %p132, %p133
      %p135 = scmp.ne.s32.totalorder %s121, %s122
      %p136 = scmp.eq.s32.totalorder %s22, 1
      %p137 = por %p135, %p136
      %p139 = scmp.ne.s32.totalorder %s122, %s138
      %p140 = scmp.eq.s32.totalorder %s22, 0
      %p141 = por %p139, %p140
      %p142 = scmp.le.s32.totalorder 1, %s16
      %p143 = scmp.lt.s32.totalorder %s16, 3
      %p144 = pnand %p142, %p143
      %p145 = pneg %p144
      // Predicated region
      $region9: #{tpu_custom_call.1} parent=5 // pred_check
        _
      $region10: #{tpu_custom_call.1} parent=5 // pred_check_branch
        %147 = sbr.rel (%p144) target = $region12
      $region11: #{tpu_custom_call.1} parent=5 // pred_region
        %s148 = ssub.s32 %s16, 1
        // Predicated region
        $region13: #{tpu_custom_call.1} parent=11 // pred_check
          %p149 = pneg %p80
        $region14: #{tpu_custom_call.1} parent=11 // pred_check_branch
          %151 = sbr.rel (%p149) target = $region16
        $region15: #{tpu_custom_call.1} parent=11 // pred_region
          %s153 = ssub.s32 2048, 2048
          %154 = vsyncadd [#allocation6], %s153
          %s155 = smul.addr %s26, 128
          %s156 = scalar_lea.hbm %s1, %s155
          %s157 = sshll.u32 [#allocation5], 4
          %s158 = int_to_ptr.vmem [resolvable:$true] %s157
          %163 = dma.hbm_to_vmem [thread:$0]  %s156, 2048, %s158, [#allocation6], 128, 128, 8
        $region16: #{tpu_custom_call.1} parent=11 // pred_fallthru
          _
        // Predicated region
        $region17: #{tpu_custom_call.1} parent=11 // pred_check
          %p164 = pneg %p106
        $region18: #{tpu_custom_call.1} parent=11 // pred_check_branch
          %166 = sbr.rel (%p164) target = $region20
        $region19: #{tpu_custom_call.1} parent=11 // pred_region
          %p167 = scmp.lt.s32.totalorder %s26, 0
          %s168 = scalar_select %p167, %s26, 0
          %s169 = scalar_lea.vmem %s2, %s168
        $region20: #{tpu_custom_call.1} parent=11 // pred_fallthru
          _
      $region12: #{tpu_custom_call.1} parent=5 // pred_fallthru
        _
      %p170 = scmp.lt.s32.totalorder %s16, 2
      // Predicated region
      $region21: #{tpu_custom_call.1} parent=5 // pred_check
        %p171 = pneg %p170
      $region22: #{tpu_custom_call.1} parent=5 // pred_check_branch
        %173 = sbr.rel (%p171) target = $region24
      $region23: #{tpu_custom_call.1} parent=5 // pred_region
        // Predicated region
        $region25: #{tpu_custom_call.1} parent=23 // pred_check
          %p174 = pneg %p48
        $region26: #{tpu_custom_call.1} parent=23 // pred_check_branch
          %176 = sbr.rel (%p174) target = $region28
        $region27: #{tpu_custom_call.1} parent=23 // pred_region
          %s177 = sand.u32 %s38, 1
          %s178 = scalar_lea.sflag [#allocation3], %s177
          %s179 = sand.u32 %s38, 1
          %s180 = smul.addr %s179, 32
          %s181 = scalar_lea.vmem [#allocation2], %s180
          %s182 = smul.u32 4, %s23
          %s184 = ssub.s32 512, 512
          %185 = vsyncadd %s178, %s184
          %s186 = smul.addr %s182, 128
          %s187 = scalar_lea.hbm %s0, %s186
          %s188 = sshll.u32 %s181, 4
          %s189 = int_to_ptr.vmem [resolvable:$true] %s188
          %194 = dma.hbm_to_vmem [thread:$0]  %s187, 512, %s189, %s178, 128, 128, 8
        $region28: #{tpu_custom_call.1} parent=23 // pred_fallthru
          _
      $region24: #{tpu_custom_call.1} parent=5 // pred_fallthru
        _
      %p195 = scmp.le.s32.totalorder 1, %s16
      %p196 = scmp.lt.s32.totalorder %s16, 3
      %p197 = pnand %p195, %p196
      %p198 = pneg %p197
      // Predicated region
      $region29: #{tpu_custom_call.1} parent=5 // pred_check
        _
      $region30: #{tpu_custom_call.1} parent=5 // pred_check_branch
        %200 = sbr.rel (%p197) target = $region32
      $region31: #{tpu_custom_call.1} parent=5 // pred_region
        %s201 = ssub.s32 %s16, 1
        %s202 = sand.u32 %s41, 1
        %s203 = scalar_lea.sflag [#allocation3], %s202
        %s204 = sand.u32 %s41, 1
        %s205 = smul.addr %s204, 32
        %s206 = scalar_lea.vmem [#allocation2], %s205
        // Predicated region
        $region33: #{tpu_custom_call.1} parent=31 // pred_check
          %p207 = pneg %p54
        $region34: #{tpu_custom_call.1} parent=31 // pred_check_branch
          %209 = sbr.rel (%p207) target = $region36
        $region35: #{tpu_custom_call.1} parent=31 // pred_region
          %210 = dma.done %s203, 512
        $region36: #{tpu_custom_call.1} parent=31 // pred_fallthru
          _
        // Predicated region
        $region37: #{tpu_custom_call.1} parent=31 // pred_check
          %p211 = pneg %p80
        $region38: #{tpu_custom_call.1} parent=31 // pred_check_branch
          %213 = sbr.rel (%p211) target = $region40
        $region39: #{tpu_custom_call.1} parent=31 // pred_region
          %214 = dma.done [#allocation6], 2048
        $region40: #{tpu_custom_call.1} parent=31 // pred_fallthru
          _
        %s215 = sand.u32 %s41, 1
        %s216 = scalar_lea.sflag [#allocation3], %s215
        %s217 = sand.u32 %s41, 1
        %s218 = smul.addr %s217, 32
        %s219 = scalar_lea.vmem [#allocation2], %s218
        %p220 = pneg %p54
        %p221 = pneg %p51
        %p222 = pneg %p80
        %p223 = pneg %p77
        %p224 = scmp.lt.s32.totalorder %s26, 0
        %s225 = scalar_select %p224, %s26, 0
        %s226 = scalar_lea.vmem %s2, %s225
        %p227 = pneg %p106
        %p228 = pneg %p103
        %p229 = pneg %p134
        %p230 = pneg %p131
        %s231 = sand.u32 %s121, 1
        %s232 = scalar_lea.sflag [#allocation4], %s231
        %s233 = sand.u32 %s121, 1
        %s234 = smul.addr %s233, 32
        %s235 = scalar_lea.vmem [#allocation7], %s234
        %s236 = smul.u32 4, %s25
        %p237 = scmp.lt.s32.totalorder %s26, 0
        %s238 = scalar_select %p237, %s26, 0
        %s239 = scalar_lea.vmem %s2, %s238
        %s240 = smul.u32 4, %s25
        %v241 = vld [vmem:[%s206] sm:$0xff]
        %v242 = vld [vmem:[%s206 + $0x8] sm:$0xff]
        %v243 = vld [vmem:[%s206 + $0x10] sm:$0xff]
        %v244 = vld [vmem:[%s206 + $0x18] sm:$0xff]
        %v245 = vld [vmem:[#allocation5] sm:$0xff]
        %v246 = vld [vmem:[#allocation5 + $0x8] sm:$0xff]
        %v247 = vld [vmem:[#allocation5 + $0x10] sm:$0xff]
        %v248 = vld [vmem:[#allocation5 + $0x18] sm:$0xff]
        %v249 = vld [vmem:[#allocation5 + $0x20] sm:$0xff]
        %v250 = vld [vmem:[#allocation5 + $0x28] sm:$0xff]
        %v251 = vld [vmem:[#allocation5 + $0x30] sm:$0xff]
        %v252 = vld [vmem:[#allocation5 + $0x38] sm:$0xff]
        %v253 = vld [vmem:[#allocation5 + $0x40] sm:$0xff]
        %v254 = vld [vmem:[#allocation5 + $0x48] sm:$0xff]
        %v255 = vld [vmem:[#allocation5 + $0x50] sm:$0xff]
        %v256 = vld [vmem:[#allocation5 + $0x58] sm:$0xff]
        %v257 = vld [vmem:[#allocation5 + $0x60] sm:$0xff]
        %v258 = vld [vmem:[#allocation5 + $0x68] sm:$0xff]
        %v259 = vld [vmem:[#allocation5 + $0x70] sm:$0xff]
        %v260 = vld [vmem:[#allocation5 + $0x78] sm:$0xff]
        %v261 = vld [vmem:[%s239] sm:$0x1]
        %v263 = vlaneseq
        %v264 = vshrl.u32 %v263, 7
        %v265 = vsub.s32 0, %v264
        %v266 = vrot.slane %v261, %v265
        %268 = vmatprep.subr.mxu0 0.0
        %269 = vmatpush1.msra.mxu0 %v260
        %270 = vmatprep.subr.mxu0 0.0
        %271 = vmatpush1.msra.mxu0 %v259
        %272 = vmatprep.subr.mxu0 0.0
        %273 = vmatpush1.msra.mxu0 %v258
        %274 = vmatprep.subr.mxu0 0.0
        %275 = vmatpush1.msra.mxu0 %v257
        %276 = vmatprep.subr.mxu0 0.0
        %277 = vmatpush1.msra.mxu0 %v256
        %278 = vmatprep.subr.mxu0 0.0
        %279 = vmatpush1.msra.mxu0 %v255
        %280 = vmatprep.subr.mxu0 0.0
        %281 = vmatpush1.msra.mxu0 %v254
        %282 = vmatprep.subr.mxu0 0.0
        %283 = vmatpush1.msra.mxu0 %v253
        %284 = vmatprep.subr.mxu0 0.0
        %285 = vmatpush1.msra.mxu0 %v252
        %286 = vmatprep.subr.mxu0 0.0
        %287 = vmatpush1.msra.mxu0 %v251
        %288 = vmatprep.subr.mxu0 0.0
        %289 = vmatpush1.msra.mxu0 %v250
        %290 = vmatprep.subr.mxu0 0.0
        %291 = vmatpush1.msra.mxu0 %v249
        %292 = vmatprep.subr.mxu0 0.0
        %293 = vmatpush1.msra.mxu0 %v248
        %294 = vmatprep.subr.mxu0 0.0
        %295 = vmatpush1.msra.mxu0 %v247
        %296 = vmatprep.subr.mxu0 0.0
        %297 = vmatpush1.msra.mxu0 %v246
        %298 = vmatprep.subr.mxu0 0.0
        %299 = vmatpush1.msra.mxu0 %v245
        %300 = vmatprep.subr.mxu0 0.0
        %301 = vmatpush2.msra.mxu0 0.0
        %302 = vmatprep.subr.mxu0 0.0
        %303 = vmatpush2.msra.mxu0 0.0
        %304 = vmatprep.subr.mxu0 0.0
        %305 = vmatpush2.msra.mxu0 0.0
        %306 = vmatprep.subr.mxu0 0.0
        %307 = vmatpush2.msra.mxu0 0.0
        %308 = vmatprep.subr.mxu0 0.0
        %309 = vmatpush2.msra.mxu0 0.0
        %310 = vmatprep.subr.mxu0 0.0
        %311 = vmatpush2.msra.mxu0 0.0
        %312 = vmatprep.subr.mxu0 0.0
        %313 = vmatpush2.msra.mxu0 0.0
        %314 = vmatprep.subr.mxu0 0.0
        %315 = vmatpush2.msra.mxu0 0.0
        %316 = vmatprep.subr.mxu0 0.0
        %317 = vmatpush2.msra.mxu0 0.0
        %318 = vmatprep.subr.mxu0 0.0
        %319 = vmatpush2.msra.mxu0 0.0
        %320 = vmatprep.subr.mxu0 0.0
        %321 = vmatpush2.msra.mxu0 0.0
        %322 = vmatprep.subr.mxu0 0.0
        %323 = vmatpush2.msra.mxu0 0.0
        %324 = vmatprep.subr.mxu0 0.0
        %325 = vmatpush2.msra.mxu0 0.0
        %326 = vmatprep.subr.mxu0 0.0
        %327 = vmatpush2.msra.mxu0 0.0
        %328 = vmatprep.subr.mxu0 0.0
        %329 = vmatpush2.msra.mxu0 0.0
        %330 = vmatprep.subr.mxu0 0.0
        %331 = vmatpush2.msra.mxu0 0.0
        %332 = vmatprep.mubr.f32.mxu0 0.0
        %333 = vmatmul.mubr.f32.gmra.mxu0 %v241
        %v334 = vpop.f32.mrf.mxu0
        %v335 = vadd.f32 %v266, %v334
        %v336 = vpop.f32.mrf.mxu0
        %337 = vmatprep.mubr.f32.mxu0 0.0
        %338 = vmatmul.mubr.f32.gmra.mxu0 %v242
        %v339 = vpop.f32.mrf.mxu0
        %v340 = vadd.f32 %v266, %v339
        %v341 = vpop.f32.mrf.mxu0
        %342 = vmatprep.mubr.f32.mxu0 0.0
        %343 = vmatmul.mubr.f32.gmra.mxu0 %v243
        %v344 = vpop.f32.mrf.mxu0
        %v345 = vadd.f32 %v266, %v344
        %v346 = vpop.f32.mrf.mxu0
        %347 = vmatprep.mubr.f32.mxu0 0.0
        %348 = vmatmul.mubr.f32.gmra.mxu0 %v244
        %v349 = vpop.f32.mrf.mxu0
        %v350 = vadd.f32 %v266, %v349
        %v351 = vpop.f32.mrf.mxu0
        %352 = vdwg.mxu0
        %353 = vst [vmem:[%s235] sm:$0xff] %v335
        %354 = vst [vmem:[%s235 + $0x8] sm:$0xff] %v340
        %355 = vst [vmem:[%s235 + $0x10] sm:$0xff] %v345
        %356 = vst [vmem:[%s235 + $0x18] sm:$0xff] %v350
        %s357 = sand.u32 %s121, 1
        %s358 = scalar_lea.sflag [#allocation4], %s357
        %s359 = sand.u32 %s121, 1
        %s360 = smul.addr %s359, 32
        %s361 = scalar_lea.vmem [#allocation7], %s360
        // Predicated region
        $region41: #{tpu_custom_call.1} parent=31 // pred_check
          %p362 = pneg %p131
        $region42: #{tpu_custom_call.1} parent=31 // pred_check_branch
          %364 = sbr.rel (%p362) target = $region44
        $region43: #{tpu_custom_call.1} parent=31 // pred_region
          %s365 = smul.u32 4, %s25
          %s367 = ssub.s32 512, 512
          %368 = vsyncadd %s358, %s367
          %s369 = sadd.s32 %s26, %s365
          %s370 = smul.addr %s369, 128
          %s371 = scalar_lea.hbm %s3, %s370
          %s372 = sshll.u32 %s361, 4
          %s373 = int_to_ptr.vmem [resolvable:$true] %s372
          %378 = dma.vmem_to_hbm [thread:$0]  %s373, 512, %s371, %s358, 128, 128, 8
        $region44: #{tpu_custom_call.1} parent=31 // pred_fallthru
          _
      $region32: #{tpu_custom_call.1} parent=5 // pred_fallthru
        _
      %p379 = scmp.le.s32.totalorder 2, %s16
      // Predicated region
      $region45: #{tpu_custom_call.1} parent=5 // pred_check
        %p380 = pneg %p379
      $region46: #{tpu_custom_call.1} parent=5 // pred_check_branch
        %382 = sbr.rel (%p380) target = $region48
      $region47: #{tpu_custom_call.1} parent=5 // pred_region
        %s383 = ssub.s32 %s16, 2
        // Predicated region
        $region49: #{tpu_custom_call.1} parent=47 // pred_check
          %p384 = pneg %p137
        $region50: #{tpu_custom_call.1} parent=47 // pred_check_branch
          %386 = sbr.rel (%p384) target = $region52
        $region51: #{tpu_custom_call.1} parent=47 // pred_region
          %s387 = sand.u32 %s122, 1
          %s388 = scalar_lea.sflag [#allocation4], %s387
          %s389 = sand.u32 %s122, 1
          %s390 = smul.addr %s389, 32
          %s391 = scalar_lea.vmem [#allocation7], %s390
          %392 = dma.done %s388, 512
        $region52: #{tpu_custom_call.1} parent=47 // pred_fallthru
          _
      $region48: #{tpu_custom_call.1} parent=5 // pred_fallthru
        _
    $region6: #{tpu_custom_call.1} parent=1 // loop_footer
      %s20 = sadd.s32 1, %s16
    $region7: #{tpu_custom_call.1} parent=1 // loop_footer_branch
      %15 = sbr.rel target = $region3
    $region8: #{tpu_custom_call.1} parent=1 // loop_exit
      _
    %393 = vsyncpa [#allocation3], 1
    %s394 = scalar_lea.sflag [#allocation3], 1
    %395 = vsyncpa %s394, 1
    %396 = vsyncpa [#allocation6], 1
    %397 = vsyncpa [#allocation4], 1
    %s398 = scalar_lea.sflag [#allocation4], 1
    %399 = vsyncpa %s398, 1

</llo_original>
